<compile_context>
chip_gen: v6e
topology: v6e:2x2x1
jax: 0.10.0
libtpu: 0.0.40
codegen_flags: <defaults>
</compile_context>

<pallas_src>
import functools

import jax
import jax.numpy as jnp
from jax import lax
from jax.experimental import pallas as pl
from jax.experimental.pallas import tpu as pltpu


# ---------------------------------------------------------------------------
# Tiling constants / helpers
# ---------------------------------------------------------------------------
_TEMP_ELEMS = 8192  # per f32 temporary: 8 vregs -> ~4 live arrays ~32 vregs


def _cdiv(a, b):
    return -(-a // b)


def _pow2_floor(x):
    x = max(1, int(x))
    return 1 << (x.bit_length() - 1)


def _hw_budgets():
    """(block_bytes_per_input, vmem_limit_bytes), per TPU generation.

    Defaults are safe on every generation (v7x has only 64 MiB VMEM/TC:
    2 inputs x 2 buffers x 8 MiB = 32 MiB <= 48 MiB limit).  128 MiB chips
    (v5e/v6e) get larger blocks and a higher scoped-VMEM limit.
    """
    block_bytes = 8 * 1024 * 1024
    vmem_limit = 48 * 1024 * 1024
    try:
        info = pltpu.get_tpu_info()
        cap = getattr(info, "vmem_capacity_bytes", None)
        if cap is not None and int(cap) >= 96 * 1024 * 1024:
            block_bytes = 12 * 1024 * 1024
            vmem_limit = 80 * 1024 * 1024
    except Exception:
        pass  # conservative defaults
    return block_bytes, vmem_limit


# ---------------------------------------------------------------------------
# Kernel
# ---------------------------------------------------------------------------
def _soft_iou_kernel(p_ref, t_ref, pt_ref, sq_ref, *, chunk, acc_w, n_inner,
                     n_col_blocks, n_full_last, tail_valid):
    """Grid = (row_blocks, col_blocks); the column axis is the reduction.

    Outputs (accumulated directly in their resident VMEM blocks):
      pt_ref: (tile_rows, acc_w) lane-partial sums of p*t
      sq_ref: (tile_rows, acc_w) lane-partial sums of (p+t)^2
    """
    k = pl.program_id(1)

    @pl.when(k == 0)
    def _init():
        pt_ref[...] = jnp.zeros_like(pt_ref)
        sq_ref[...] = jnp.zeros_like(sq_ref)

    def _update(p, t):
        # p, t: (tile_rows, chunk) f32; any garbage already masked to zero.
        prod = p * t                      # p*t
        s = p + t
        ssq = s * s                       # (p+t)^2 = p^2 + 2*p*t + t^2
        # Lane-aligned tree fold down to acc_w lanes (pure VPU adds; every
        # slice lands on a 128-lane boundary -> whole vregs, no relayout).
        w = chunk
        while w > acc_w:
            h = w // 2
            prod = prod[:, :h] + prod[:, h:]
            ssq = ssq[:, :h] + ssq[:, h:]
            w = h
        pt_ref[...] += prod
        sq_ref[...] += ssq

    def _full_chunk(c, carry):
        off = c * chunk
        if not isinstance(off, int):
            off = pl.multiple_of(off, chunk)
        p = p_ref[:, pl.ds(off, chunk)].astype(jnp.float32)
        t = t_ref[:, pl.ds(off, chunk)].astype(jnp.float32)
        _update(p, t)
        return carry

    def _run_full(n):
        if n <= 0:
            return
        if n == 1:
            _full_chunk(0, 0)
        else:
            lax.fori_loop(0, n, _full_chunk, 0, unroll=min(n, 4))

    def _masked_tail():
        off = n_full_last * chunk          # static python int
        p = p_ref[:, pl.ds(off, chunk)].astype(jnp.float32)
        t = t_ref[:, pl.ds(off, chunk)].astype(jnp.float32)
        lane = lax.broadcasted_iota(jnp.int32, p.shape, 1)
        keep = lane < tail_valid
        # Mask BEFORE the multiplies: out-of-bounds VMEM is undefined and may
        # contain NaN/Inf which would otherwise poison the accumulators.
        _update(jnp.where(keep, p, 0.0), jnp.where(keep, t, 0.0))

    def _tail_block():
        _run_full(n_full_last)
        if tail_valid > 0:
            _masked_tail()

    # Static specialization: only the last column block can be ragged.
    if n_col_blocks == 1:
        _tail_block()
    elif n_full_last == n_inner and tail_valid == 0:
        _run_full(n_inner)                 # columns divide the blocks exactly
    else:
        @pl.when(k < n_col_blocks - 1)
        def _bulk():
            _run_full(n_inner)

        @pl.when(k == n_col_blocks - 1)
        def _tail():
            _tail_block()


# ---------------------------------------------------------------------------
# Wrapper
# ---------------------------------------------------------------------------
def soft_iou_loss(y_preds, y_truths, eps=1e-8):
    assert y_preds.shape == y_truths.shape
    bs, num_classes, h, w = y_preds.shape
    n_rows = bs * num_classes
    n_cols = h * w

    # Flatten: rows = (b, c) pairs, cols = lane-dense spatial extent.
    # Inputs stay in their at-rest dtype; the kernel upcasts per chunk.
    p2d = y_preds.reshape(n_rows, n_cols)
    t2d = y_truths.reshape(n_rows, n_cols)

    block_bytes, vmem_limit = _hw_budgets()
    max_item = max(p2d.dtype.itemsize, t2d.dtype.itemsize)
    min_item = min(p2d.dtype.itemsize, t2d.dtype.itemsize)

    # Sublane multiple for the second-minor block dim (packed narrow dtypes).
    row_mult = max(8, 32 // max(1, min_item))

    # --- Row tiling: small row tiles, wide column blocks.  No padding: a
    # ragged last row block reads/writes garbage rows that stay confined to
    # their own (discarded) output rows.
    if n_rows <= row_mult:
        tile_rows = n_rows                 # full-dim block: exempt from sublane rule
    else:
        tile_rows = row_mult
    n_row_blocks = _cdiv(n_rows, tile_rows)
    n_rows_out = n_row_blocks * tile_rows

    # --- Inner chunk: 128 * 2^k lanes, sized so the ~4 live f32 temporaries
    # stay within the vreg budget while keeping accumulator RMW traffic 4-8x
    # below the input stream.
    if n_cols >= 128:
        units_cols = _pow2_floor(n_cols // 128)
        units_budget = _pow2_floor(max(1, (_TEMP_ELEMS // tile_rows) // 128))
        chunk = 128 * max(1, min(8, units_cols, units_budget))
        acc_w = 128
    else:
        chunk = n_cols                     # tiny spatial extent: one full-width chunk
        acc_w = n_cols

    # --- Column (grid) blocks: multi-MiB DMAs sized by the at-rest itemsize.
    target_cols = max(chunk, (block_bytes // max_item) // max(1, tile_rows))
    n_inner = max(1, min(target_cols // chunk, n_cols // chunk))
    tile_cols = n_inner * chunk            # never exceeds n_cols
    n_col_blocks = _cdiv(n_cols, tile_cols)
    rem = n_cols - (n_col_blocks - 1) * tile_cols   # valid cols in last block
    n_full_last = rem // chunk
    tail_valid = rem % chunk

    kernel = functools.partial(
        _soft_iou_kernel, chunk=chunk, acc_w=acc_w, n_inner=n_inner,
        n_col_blocks=n_col_blocks, n_full_last=n_full_last,
        tail_valid=tail_valid)

    cost = pl.CostEstimate(
        flops=6 * n_rows * n_cols,
        transcendentals=0,
        bytes_accessed=(n_rows * n_cols * (p2d.dtype.itemsize + t2d.dtype.itemsize)
                        + 2 * n_rows_out * acc_w * 4))

    pt_part, sq_part = pl.pallas_call(
        kernel,
        out_shape=(jax.ShapeDtypeStruct((n_rows_out, acc_w), jnp.float32),
                   jax.ShapeDtypeStruct((n_rows_out, acc_w), jnp.float32)),
        grid_spec=pltpu.PrefetchScalarGridSpec(
            num_scalar_prefetch=0,
            grid=(n_row_blocks, n_col_blocks),
            in_specs=[
                pl.BlockSpec((tile_rows, tile_cols), lambda i, k: (i, k)),
                pl.BlockSpec((tile_rows, tile_cols), lambda i, k: (i, k)),
            ],
            out_specs=[
                pl.BlockSpec((tile_rows, acc_w), lambda i, k: (i, 0)),
                pl.BlockSpec((tile_rows, acc_w), lambda i, k: (i, 0)),
            ],
        ),
        compiler_params=pltpu.CompilerParams(
            dimension_semantics=("parallel", "arbitrary"),
            vmem_limit_bytes=vmem_limit),
        cost_estimate=cost,
    )(p2d, t2d)

    # Tiny finalize in plain JAX (cross-lane reduce + iou math + mean).
    s_pt = jnp.sum(pt_part[:n_rows], axis=1)       # sum p*t   per (b, c)
    s_sq = jnp.sum(sq_part[:n_rows], axis=1)       # sum (p+t)^2 per (b, c)
    inter = s_pt + eps * 0.5
    denom = s_sq - 3.0 * s_pt + eps * 0.5          # union - intersection
    iou = inter / denom
    # mean over classes then over batch == overall mean (equal weights)
    return 1.0 - jnp.mean(iou)


# ---------------------------------------------------------------------------
# Pure-JAX reference mirroring the PyTorch forward
# ---------------------------------------------------------------------------
def _soft_iou_loss_ref(y_preds, y_truths, eps=1e-8):
    inter = jnp.sum(y_preds * y_truths, axis=(2, 3)) + eps / 2.0
    union = (jnp.sum(y_preds * y_preds, axis=(2, 3))
             + jnp.sum(y_truths * y_truths, axis=(2, 3)) + eps)
    ious = inter / (union - inter)
    return 1.0 - jnp.mean(jnp.mean(ious, axis=0))


if __name__ == "__main__":
    key = jax.random.PRNGKey(0)
    k1, k2, k3, k4, k5, k6 = jax.random.split(key, 6)

    # Main check: aligned shapes.
    bs, num_classes, h, w = 2, 4, 16, 16
    y_preds = jax.random.uniform(k1, (bs, num_classes, h, w), dtype=jnp.float32)
    y_truths = (jax.random.uniform(k2, (bs, num_classes, h, w)) > 0.5).astype(jnp.float32)
    loss = jax.block_until_ready(soft_iou_loss(y_preds, y_truths))
    ref = _soft_iou_loss_ref(y_preds, y_truths)
    assert jnp.allclose(loss, ref, rtol=1e-4, atol=1e-5), (loss, ref)

    # Awkward shapes #1: n_cols < 128 (single full-width block path).
    yp2 = jax.random.uniform(k3, (2, 3, 7, 9), dtype=jnp.float32)
    yt2 = (jax.random.uniform(k4, (2, 3, 7, 9)) > 0.5).astype(jnp.float32)
    loss2 = jax.block_until_ready(soft_iou_loss(yp2, yt2))
    ref2 = _soft_iou_loss_ref(yp2, yt2)
    assert jnp.allclose(loss2, ref2, rtol=1e-4, atol=1e-5), (loss2, ref2)

    # Awkward shapes #2: ragged rows + ragged column tail (in-kernel masking).
    yp3 = jax.random.uniform(k5, (2, 5, 9, 31), dtype=jnp.float32)
    yt3 = (jax.random.uniform(k6, (2, 5, 9, 31)) > 0.5).astype(jnp.float32)
    loss3 = jax.block_until_ready(soft_iou_loss(yp3, yt3))
    ref3 = _soft_iou_loss_ref(yp3, yt3)
    assert jnp.allclose(loss3, ref3, rtol=1e-4, atol=1e-5), (loss3, ref3)

    print("KERNEL_OK")
</pallas_src>

<mosaic_0001>
module attributes {stable_mosaic.version = 11 : i64} {
  func.func @_soft_iou_kernel(%arg0: i32, %arg1: i32, %arg2: memref<8x256xf32, #tpu.memory_space<vmem>>, %arg3: memref<8x256xf32, #tpu.memory_space<vmem>>, %arg4: memref<8x128xf32, #tpu.memory_space<vmem>>, %arg5: memref<8x128xf32, #tpu.memory_space<vmem>>) attributes {dimension_semantics = [#tpu.dimension_semantics<parallel>, #tpu.dimension_semantics<arbitrary>], iteration_bounds = array<i64: 1, 1>, scalar_prefetch = 0 : i64, scratch_operands = 0 : i64, tpu.core_type = #tpu.core_type<tc>, window_params = [{transform_indices = @transform_0, window_bounds = array<i64: 8, 256>}, {transform_indices = @transform_1, window_bounds = array<i64: 8, 256>}, {transform_indices = @transform_2, window_bounds = array<i64: 8, 128>}, {transform_indices = @transform_3, window_bounds = array<i64: 8, 128>}]} {
    %c0_i32 = arith.constant 0 : i32
    %0 = arith.cmpi eq, %arg1, %c0_i32 : i32
    %1 = arith.extui %0 : i1 to i32
    %c0_i32_0 = arith.constant 0 : i32
    %2 = arith.cmpi ne, %1, %c0_i32_0 : i32
    scf.if %2 {
      %cst = arith.constant 0.000000e+00 : f32
      %20 = vector.broadcast %cst : f32 to vector<8x128xf32>
      %c0_12 = arith.constant 0 : index
      %c0_13 = arith.constant 0 : index
      %21 = vector.load %arg4[%c0_12, %c0_13] : memref<8x128xf32, #tpu.memory_space<vmem>>, vector<8x128xf32>
      tpu.vector_store %arg4[%c0_12, %c0_13], %20 {strides = array<i32>} : memref<8x128xf32, #tpu.memory_space<vmem>>, vector<8x128xf32>,
      %cst_14 = arith.constant 0.000000e+00 : f32
      %22 = vector.broadcast %cst_14 : f32 to vector<8x128xf32>
      %c0_15 = arith.constant 0 : index
      %c0_16 = arith.constant 0 : index
      %23 = vector.load %arg5[%c0_15, %c0_16] : memref<8x128xf32, #tpu.memory_space<vmem>>, vector<8x128xf32>
      tpu.vector_store %arg5[%c0_15, %c0_16], %22 {strides = array<i32>} : memref<8x128xf32, #tpu.memory_space<vmem>>, vector<8x128xf32>,
    } else {
    }
    %c0 = arith.constant 0 : index
    %c0_1 = arith.constant 0 : index
    %3 = vector.load %arg2[%c0, %c0_1] : memref<8x256xf32, #tpu.memory_space<vmem>>, vector<8x256xf32>
    %c0_2 = arith.constant 0 : index
    %c0_3 = arith.constant 0 : index
    %4 = vector.load %arg3[%c0_2, %c0_3] : memref<8x256xf32, #tpu.memory_space<vmem>>, vector<8x256xf32>
    %5 = arith.mulf %3, %4 : vector<8x256xf32>
    %6 = arith.addf %3, %4 : vector<8x256xf32>
    %7 = arith.mulf %6, %6 : vector<8x256xf32>
    %8 = vector.extract_strided_slice %5 {offsets = [0, 0], sizes = [8, 128], strides = [1, 1]} : vector<8x256xf32> to vector<8x128xf32>
    %9 = vector.extract_strided_slice %5 {offsets = [0, 128], sizes = [8, 128], strides = [1, 1]} : vector<8x256xf32> to vector<8x128xf32>
    %10 = arith.addf %8, %9 : vector<8x128xf32>
    %11 = vector.extract_strided_slice %7 {offsets = [0, 0], sizes = [8, 128], strides = [1, 1]} : vector<8x256xf32> to vector<8x128xf32>
    %12 = vector.extract_strided_slice %7 {offsets = [0, 128], sizes = [8, 128], strides = [1, 1]} : vector<8x256xf32> to vector<8x128xf32>
    %13 = arith.addf %11, %12 : vector<8x128xf32>
    %c0_4 = arith.constant 0 : index
    %c0_5 = arith.constant 0 : index
    %14 = vector.load %arg4[%c0_4, %c0_5] : memref<8x128xf32, #tpu.memory_space<vmem>>, vector<8x128xf32>
    %15 = arith.addf %14, %10 : vector<8x128xf32>
    %c0_6 = arith.constant 0 : index
    %c0_7 = arith.constant 0 : index
    %16 = vector.load %arg4[%c0_6, %c0_7] : memref<8x128xf32, #tpu.memory_space<vmem>>, vector<8x128xf32>
    tpu.vector_store %arg4[%c0_6, %c0_7], %15 {strides = array<i32>} : memref<8x128xf32, #tpu.memory_space<vmem>>, vector<8x128xf32>,
    %c0_8 = arith.constant 0 : index
    %c0_9 = arith.constant 0 : index
    %17 = vector.load %arg5[%c0_8, %c0_9] : memref<8x128xf32, #tpu.memory_space<vmem>>, vector<8x128xf32>
    %18 = arith.addf %17, %13 : vector<8x128xf32>
    %c0_10 = arith.constant 0 : index
    %c0_11 = arith.constant 0 : index
    %19 = vector.load %arg5[%c0_10, %c0_11] : memref<8x128xf32, #tpu.memory_space<vmem>>, vector<8x128xf32>
    tpu.vector_store %arg5[%c0_10, %c0_11], %18 {strides = array<i32>} : memref<8x128xf32, #tpu.memory_space<vmem>>, vector<8x128xf32>,
    return
  }
  func.func @transform_0(%arg0: i32, %arg1: i32) -> (i32, i32) {
    %c0_i32 = arith.constant 0 : i32
    return %arg0, %arg1 : i32, i32
  }
  func.func @transform_1(%arg0: i32, %arg1: i32) -> (i32, i32) {
    %c0_i32 = arith.constant 0 : i32
    return %arg0, %arg1 : i32, i32
  }
  func.func @transform_2(%arg0: i32, %arg1: i32) -> (i32, i32) {
    %c0_i32 = arith.constant 0 : i32
    %c0_i32_0 = arith.constant 0 : i32
    return %arg0, %c0_i32 : i32, i32
  }
  func.func @transform_3(%arg0: i32, %arg1: i32) -> (i32, i32) {
    %c0_i32 = arith.constant 0 : i32
    %c0_i32_0 = arith.constant 0 : i32
    return %arg0, %c0_i32 : i32, i32
  }
}

</mosaic_0001>

<llo_original>
// kernel: tpu_custom_call.1
$region0: #{tpu_custom_call.1}
  #allocation0 [shape = 'u32[]', space=smem, size = 0x4, offset = 0x4, fixed_abs, tag = 'smem constant byte address 0x4 - core index']
  #allocation1 [shape = 'u32[144,128]{1,0:T(1,128)}', space=vmem, size = 0x12000, scoped, tag = 'internal scratch']
  %s0 = inlined_call_operand.hbm [shape: f32[8,256], index: 0, kind: input, shape index: {}]
  %s1 = inlined_call_operand.hbm [shape: f32[8,256], index: 1, kind: input, shape index: {}]
  %s2 = inlined_call_operand.hbm [shape: f32[8,128], index: 2, kind: output, shape index: {0}]
  %s3 = inlined_call_operand.hbm [shape: f32[8,128], index: 3, kind: output, shape index: {1}]
  %4 = xla_tuple %s2, %s3
  %s5 = sld [smem:[#allocation0]]
  $region38: #{tpu_custom_call.1} parent=0
    _
  %s7 = ssub.s32 1, %s5
  %s8 = scalar_select 0, %s7, %s5
  $region1: #{tpu_custom_call.1} parent=0
    #allocation2 [shape = 'u8[8192]{0}', space=vmem, size = 0x2000, scoped, tag = 'input window, operand 0, single buffered']
    #allocation3 [shape = 's32[1]{0}', space=sflag, size = 0x4, scoped, tag = 'scoped memory for tpu_custom_call.1']
    #allocation4 [shape = 's32[1]{0}', space=sflag, size = 0x4, scoped, tag = 'scoped memory for tpu_custom_call.1']
    #allocation5 [shape = 'u8[8192]{0}', space=vmem, size = 0x2000, scoped, tag = 'input window, operand 1, single buffered']
    #allocation6 [shape = 's32[1]{0}', space=sflag, size = 0x4, scoped, tag = 'scoped memory for tpu_custom_call.1']
    #allocation7 [shape = 'u8[4096]{0}', space=vmem, size = 0x1000, scoped, tag = 'output window, operand 0, single buffered']
    #allocation8 [shape = 'u8[4096]{0}', space=vmem, size = 0x1000, scoped, tag = 'output window, operand 1, single buffered']
    #allocation9 [shape = 's32[1]{0}', space=sflag, size = 0x4, scoped, tag = 'scoped memory for tpu_custom_call.1']
    %9 = vsyncpa [#allocation3], 0
    %10 = vsyncpa [#allocation6], 0
    %11 = vsyncpa [#allocation4], 0
    %12 = vsyncpa [#allocation9], 0
    // Predicated region
    $region2: #{tpu_custom_call.1} parent=1 // pred_check
      _
    $region3: #{tpu_custom_call.1} parent=1 // pred_check_branch
      %14 = sbr.rel (0) target = $region5
    $region4: #{tpu_custom_call.1} parent=1 // pred_region
      %s16 = ssub.s32 256, 256
      %17 = vsyncadd [#allocation3], %s16
      %s19 = sshll.u32 [#allocation2], 4
      %s20 = int_to_ptr.vmem [resolvable:$true] %s19
      %22 = dma.hbm_to_vmem [thread:$0]  %s0, 256, %s20, [#allocation3]
    $region5: #{tpu_custom_call.1} parent=1 // pred_fallthru
      _
    // Predicated region
    $region6: #{tpu_custom_call.1} parent=1 // pred_check
      _
    $region7: #{tpu_custom_call.1} parent=1 // pred_check_branch
      %24 = sbr.rel (0) target = $region9
    $region8: #{tpu_custom_call.1} parent=1 // pred_region
      %s26 = ssub.s32 256, 256
      %27 = vsyncadd [#allocation6], %s26
      %s29 = sshll.u32 [#allocation5], 4
      %s30 = int_to_ptr.vmem [resolvable:$true] %s29
      %32 = dma.hbm_to_vmem [thread:$0]  %s1, 256, %s30, [#allocation6]
    $region9: #{tpu_custom_call.1} parent=1 // pred_fallthru
      _
    // Predicated region
    $region10: #{tpu_custom_call.1} parent=1 // pred_check
      _
    $region11: #{tpu_custom_call.1} parent=1 // pred_check_branch
      %34 = sbr.rel (0) target = $region13
    $region12: #{tpu_custom_call.1} parent=1 // pred_region
      %35 = dma.done [#allocation3], 256
    $region13: #{tpu_custom_call.1} parent=1 // pred_fallthru
      _
    // Predicated region
    $region14: #{tpu_custom_call.1} parent=1 // pred_check
      _
    $region15: #{tpu_custom_call.1} parent=1 // pred_check_branch
      %37 = sbr.rel (0) target = $region17
    $region16: #{tpu_custom_call.1} parent=1 // pred_region
      %38 = dma.done [#allocation6], 256
    $region17: #{tpu_custom_call.1} parent=1 // pred_fallthru
      _
    %p39 = scmp.eq.s32.totalorder 0, 0
    // Predicated region
    $region18: #{tpu_custom_call.1} parent=1 // pred_check
      %p40 = pneg %p39
    $region19: #{tpu_custom_call.1} parent=1 // pred_check_branch
      %42 = sbr.rel (%p40) target = $region21
    $region20: #{tpu_custom_call.1} parent=1 // pred_region
      %43 = vst [vmem:[#allocation7] sm:$0xff] 0.0
      %44 = vst [vmem:[#allocation8] sm:$0xff] 0.0
    $region21: #{tpu_custom_call.1} parent=1 // pred_fallthru
      _
    %v45 = vld [vmem:[#allocation2] sm:$0xff]
    %v46 = vld [vmem:[#allocation2 + $0x8] sm:$0xff]
    %v47 = vld [vmem:[#allocation5] sm:$0xff]
    %v48 = vld [vmem:[#allocation5 + $0x8] sm:$0xff]
    %v49 = vmul.f32 %v45, %v47
    %v50 = vmul.f32 %v46, %v48
    %v51 = vadd.f32 %v45, %v47
    %v52 = vadd.f32 %v46, %v48
    %v53 = vmul.f32 %v51, %v51
    %v54 = vmul.f32 %v52, %v52
    %v55 = vadd.f32 %v49, %v50
    %v56 = vadd.f32 %v53, %v54
    %v57 = vld [vmem:[#allocation7] sm:$0xff]
    %v58 = vadd.f32 %v57, %v55
    %59 = vst [vmem:[#allocation7] sm:$0xff] %v58
    %v60 = vld [vmem:[#allocation8] sm:$0xff]
    %v61 = vadd.f32 %v60, %v56
    %62 = vst [vmem:[#allocation8] sm:$0xff] %v61
    // Predicated region
    $region22: #{tpu_custom_call.1} parent=1 // pred_check
      _
    $region23: #{tpu_custom_call.1} parent=1 // pred_check_branch
      %64 = sbr.rel (0) target = $region25
    $region24: #{tpu_custom_call.1} parent=1 // pred_region
      %s66 = ssub.s32 128, 128
      %67 = vsyncadd [#allocation4], %s66
      %s69 = sshll.u32 [#allocation7], 4
      %s70 = int_to_ptr.vmem [resolvable:$true] %s69
      %72 = dma.vmem_to_hbm [thread:$0]  %s70, 128, %s2, [#allocation4]
    $region25: #{tpu_custom_call.1} parent=1 // pred_fallthru
      _
    // Predicated region
    $region26: #{tpu_custom_call.1} parent=1 // pred_check
      _
    $region27: #{tpu_custom_call.1} parent=1 // pred_check_branch
      %74 = sbr.rel (0) target = $region29
    $region28: #{tpu_custom_call.1} parent=1 // pred_region
      %s76 = ssub.s32 128, 128
      %77 = vsyncadd [#allocation9], %s76
      %s79 = sshll.u32 [#allocation8], 4
      %s80 = int_to_ptr.vmem [resolvable:$true] %s79
      %82 = dma.vmem_to_hbm [thread:$0]  %s80, 128, %s3, [#allocation9]
    $region29: #{tpu_custom_call.1} parent=1 // pred_fallthru
      _
    // Predicated region
    $region30: #{tpu_custom_call.1} parent=1 // pred_check
      _
    $region31: #{tpu_custom_call.1} parent=1 // pred_check_branch
      %84 = sbr.rel (0) target = $region33
    $region32: #{tpu_custom_call.1} parent=1 // pred_region
      %85 = dma.done [#allocation4], 128
    $region33: #{tpu_custom_call.1} parent=1 // pred_fallthru
      _
    // Predicated region
    $region34: #{tpu_custom_call.1} parent=1 // pred_check
      _
    $region35: #{tpu_custom_call.1} parent=1 // pred_check_branch
      %87 = sbr.rel (0) target = $region37
    $region36: #{tpu_custom_call.1} parent=1 // pred_region
      %88 = dma.done [#allocation9], 128
    $region37: #{tpu_custom_call.1} parent=1 // pred_fallthru
      _
    %89 = vsyncpa [#allocation3], 1
    %90 = vsyncpa [#allocation6], 1
    %91 = vsyncpa [#allocation4], 1
    %92 = vsyncpa [#allocation9], 1

</llo_original>
